<compile_context>
chip_gen: v5e
topology: v5e:2x2
jax: 0.10.0
libtpu: 0.0.40
codegen_flags: <defaults>
</compile_context>

<pallas_src>
import functools

import jax
import jax.numpy as jnp
from jax.experimental import pallas as pl
from jax.experimental.pallas import tpu as pltpu

LANE = 128
SUBLANE = 8


def diffeq_kernel(t_ref, y_ref, coef_ref, out_ref):
    # t is a length-1 scalar-prefetch array in SMEM.
    t = t_ref[0]
    # Bundle of coefficient / forcing functions evaluated at t:
    #   a_i(t) = alpha_i                     (constant-coefficient bundle)
    #   f_i(t) = gamma_i * sin(omega_i * t)  (sinusoidal forcing bundle)
    alpha = coef_ref[0]
    gamma = coef_ref[1]
    omega = coef_ref[2]
    # yd = f0 - a0 * y   (same as -a0*y + f0, one fewer VALU op)
    out_ref[...] = gamma * jnp.sin(omega * t) - alpha * y_ref[...]


def _pad_flat(x, total):
    """Flatten to f32 and zero-pad to `total` elements (fused into the
    pallas_call via allow_input_fusion, so no standalone HBM copy)."""
    x_flat = x.astype(jnp.float32).reshape(-1)
    n = x_flat.shape[0]
    if total != n:
        x_flat = jnp.pad(x_flat, (0, total - n))
    return x_flat


@functools.partial(jax.jit, static_argnames=("block_rows",))
def diffeq_forward_pallas(t, states, alpha, gamma, omega, *, block_rows=1024):
    """Pallas path.  states: (N, d) f32; alpha/gamma/omega: N-element bundles.

    Returns yd with shape (N, 1), matching the torch module.
    """
    n = states.shape[0]

    # Rows of the dense (rows, 128) slab, multiple of the (8, 128) tile.
    rows0 = max(SUBLANE, pl.cdiv(n, LANE * SUBLANE) * SUBLANE)

    # Grid sizing: at least cdiv(rows0, block_rows) steps (VMEM cap), and aim
    # for >= 8 steps so v7x's 2 TensorCores both get work -- but never shrink
    # tiles below ~256 rows (HBM-roofline plateau for f32 elementwise).
    steps = max(pl.cdiv(rows0, block_rows), min(8, pl.cdiv(rows0, 256)))
    bm = pl.cdiv(pl.cdiv(rows0, steps), SUBLANE) * SUBLANE
    rows = pl.cdiv(rows0, bm) * bm
    grid = (rows // bm,)
    total = rows * LANE

    # Boundary glue (matches torch's states[:, 0].reshape(1, -1)), presented
    # to the kernel as lane/sublane-dense slabs.  The pad/reshape/stack
    # producers are candidates for input fusion into the pallas_call.
    y_slab = _pad_flat(states[:, 0], total).reshape(rows, LANE)
    coef_slab = jnp.stack([
        _pad_flat(alpha, total),
        _pad_flat(gamma, total),
        _pad_flat(omega, total),
    ]).reshape(3, rows, LANE)
    t_arr = jnp.asarray(t, dtype=jnp.float32).reshape(1)

    slab_spec = pl.BlockSpec((bm, LANE), lambda i, t_sm: (i, 0))
    coef_spec = pl.BlockSpec((3, bm, LANE), lambda i, t_sm: (0, i, 0))

    yd_slab = pl.pallas_call(
        diffeq_kernel,
        out_shape=jax.ShapeDtypeStruct((rows, LANE), jnp.float32),
        grid_spec=pltpu.PrefetchScalarGridSpec(
            num_scalar_prefetch=1,           # t lands in SMEM
            grid=grid,
            in_specs=[slab_spec, coef_spec],
            out_specs=slab_spec,
        ),
        compiler_params=pltpu.CompilerParams(
            dimension_semantics=("parallel",),
            # [t (scalar prefetch), y slab, coefficient slab]
            allow_input_fusion=[False, True, True],
        ),
    )(t_arr, y_slab, coef_slab)

    # Padding is zero-filled (sin(0)*0 - 0*0 = 0) and sliced off here.  When
    # n == rows*128 this is a free bitcast; otherwise one N*4B copy at the
    # torch-compat boundary.
    return yd_slab.reshape(-1)[:n].reshape(n, 1)


@jax.jit
def diffeq_reference(t, states, alpha, gamma, omega):
    """Plain fused-XLA forward (also the small-N fast path)."""
    n = states.shape[0]
    y = states[:, 0].astype(jnp.float32).reshape(1, n)
    a = alpha.astype(jnp.float32).reshape(1, n)
    g = gamma.astype(jnp.float32).reshape(1, n)
    w = omega.astype(jnp.float32).reshape(1, n)
    yd = -a * y + g * jnp.sin(w * jnp.asarray(t, jnp.float32))
    return yd.reshape(n, 1)


def diffeq_forward(t, states, alpha, gamma, omega, *, block_rows=1024,
                   min_pallas_n=4096):
    """Torch-module-equivalent forward.  Falls back to a single fused XLA op
    for small bundles, where a pallas_call is pure launch overhead."""
    n = states.shape[0]
    if n < min_pallas_n:
        return diffeq_reference(t, states, alpha, gamma, omega)
    return diffeq_forward_pallas(t, states, alpha, gamma, omega,
                                 block_rows=block_rows)


if __name__ == "__main__":
    # TODO(synk): the torch module's __init__ takes arbitrary Python callables
    # a0/f; arbitrary callables can't be lowered, so the bundle is fixed to the
    # parametric family a_i(t) = alpha_i, f_i(t) = gamma_i * sin(omega_i * t).
    key = jax.random.PRNGKey(0)

    def run_case(n, key):
        k1, k2, k3, k4 = jax.random.split(key, 4)
        alpha = jax.random.uniform(k1, (1, n), jnp.float32, 0.5, 2.0)
        gamma = jax.random.uniform(k2, (1, n), jnp.float32, -1.0, 1.0)
        omega = jax.random.uniform(k3, (1, n), jnp.float32, 0.5, 3.0)
        states = jax.random.normal(k4, (n, 1), dtype=jnp.float32)
        t = jnp.float32(0.7)

        # Force the Pallas path even at demo sizes so the kernel is exercised.
        yd = diffeq_forward(t, states, alpha, gamma, omega, min_pallas_n=0)
        yd = jax.block_until_ready(yd)

        ref = diffeq_reference(t, states, alpha, gamma, omega)
        assert yd.shape == (n, 1), yd.shape
        assert jnp.allclose(yd, ref, atol=1e-6), (n, yd, ref)

    k_a, k_b = jax.random.split(key)
    run_case(8, k_a)     # small bundle (demo size from the module)
    run_case(300, k_b)   # exercises padding + dense-slab path

    print("KERNEL_OK")
</pallas_src>

<mosaic_0001>
module attributes {stable_mosaic.version = 11 : i64} {
  func.func @diffeq_kernel(%arg0: i32, %arg1: memref<1xf32, #tpu.memory_space<smem>>, %arg2: memref<8x128xf32, #tpu.memory_space<vmem>>, %arg3: memref<3x8x128xf32, #tpu.memory_space<vmem>>, %arg4: memref<8x128xf32, #tpu.memory_space<vmem>>) attributes {dimension_semantics = [#tpu.dimension_semantics<parallel>], iteration_bounds = array<i64: 1>, scalar_prefetch = 1 : i64, scratch_operands = 0 : i64, tpu.core_type = #tpu.core_type<tc>, window_params = [{transform_indices = @transform_0, window_bounds = array<i64: 8, 128>}, {transform_indices = @transform_1, window_bounds = array<i64: 3, 8, 128>}, {transform_indices = @transform_2, window_bounds = array<i64: 8, 128>}]} {
    %c0 = arith.constant 0 : index
    %0 = memref.load %arg1[%c0] : memref<1xf32, #tpu.memory_space<smem>>
    %c0_0 = arith.constant 0 : index
    %c0_1 = arith.constant 0 : index
    %c0_2 = arith.constant 0 : index
    %1 = vector.load %arg3[%c0_0, %c0_1, %c0_2] : memref<3x8x128xf32, #tpu.memory_space<vmem>>, vector<1x8x128xf32>
    %2 = vector.shape_cast %1 : vector<1x8x128xf32> to vector<8x128xf32>
    %c1 = arith.constant 1 : index
    %c0_3 = arith.constant 0 : index
    %c0_4 = arith.constant 0 : index
    %3 = vector.load %arg3[%c1, %c0_3, %c0_4] : memref<3x8x128xf32, #tpu.memory_space<vmem>>, vector<1x8x128xf32>
    %4 = vector.shape_cast %3 : vector<1x8x128xf32> to vector<8x128xf32>
    %c2 = arith.constant 2 : index
    %c0_5 = arith.constant 0 : index
    %c0_6 = arith.constant 0 : index
    %5 = vector.load %arg3[%c2, %c0_5, %c0_6] : memref<3x8x128xf32, #tpu.memory_space<vmem>>, vector<1x8x128xf32>
    %6 = vector.shape_cast %5 : vector<1x8x128xf32> to vector<8x128xf32>
    %7 = vector.broadcast %0 : f32 to vector<8x128xf32>
    %8 = arith.mulf %6, %7 : vector<8x128xf32>
    %9 = math.sin %8 : vector<8x128xf32>
    %10 = arith.mulf %4, %9 : vector<8x128xf32>
    %c0_7 = arith.constant 0 : index
    %c0_8 = arith.constant 0 : index
    %11 = vector.load %arg2[%c0_7, %c0_8] : memref<8x128xf32, #tpu.memory_space<vmem>>, vector<8x128xf32>
    %12 = arith.mulf %2, %11 : vector<8x128xf32>
    %13 = arith.subf %10, %12 : vector<8x128xf32>
    %c0_9 = arith.constant 0 : index
    %c0_10 = arith.constant 0 : index
    %14 = vector.load %arg4[%c0_9, %c0_10] : memref<8x128xf32, #tpu.memory_space<vmem>>, vector<8x128xf32>
    tpu.vector_store %arg4[%c0_9, %c0_10], %13 {strides = array<i32>} : memref<8x128xf32, #tpu.memory_space<vmem>>, vector<8x128xf32>,
    return
  }
  func.func @transform_0(%arg0: i32, %arg1: memref<1xf32, #tpu.memory_space<smem>>) -> (i32, i32) {
    %c0_i32 = arith.constant 0 : i32
    %c0_i32_0 = arith.constant 0 : i32
    return %arg0, %c0_i32 : i32, i32
  }
  func.func @transform_1(%arg0: i32, %arg1: memref<1xf32, #tpu.memory_space<smem>>) -> (i32, i32, i32) {
    %c0_i32 = arith.constant 0 : i32
    %c0_i32_0 = arith.constant 0 : i32
    %c0_i32_1 = arith.constant 0 : i32
    return %c0_i32, %arg0, %c0_i32_0 : i32, i32, i32
  }
  func.func @transform_2(%arg0: i32, %arg1: memref<1xf32, #tpu.memory_space<smem>>) -> (i32, i32) {
    %c0_i32 = arith.constant 0 : i32
    %c0_i32_0 = arith.constant 0 : i32
    return %arg0, %c0_i32 : i32, i32
  }
}

</mosaic_0001>

<llo_original>
// kernel: diffeq_forward_pallas.2
$region0: #{diffeq_forward_pallas.2}
  #allocation0 [shape = 'u32[]', space=smem, size = 0x4, offset = 0x4, fixed_abs, tag = 'smem constant byte address 0x4 - core index']
  #allocation1 [shape = 'u32[72,128]{1,0:T(1,128)}', space=vmem, size = 0x9000, scoped, tag = 'internal scratch']
  #allocation2 [shape = 's32[1]{0}', space=sflag, size = 0x4, scoped, tag = 'scoped memory for diffeq_forward_pallas.2']
  #allocation3 [shape = 'f32[1]{0:T(128)S(6)}', space=smem, size = 0x200, scoped, tag = 'prefetched SMEM operand 0']
  #allocation4 [shape = 'u32[2048]{0}', space=vmem, size = 0x2000, scoped, tag = 'scoped memory for diffeq_forward_pallas.2']
  #allocation5 [shape = 'u32[2048]{0}', space=vmem, size = 0x2000, scoped, tag = 'scoped memory for diffeq_forward_pallas.2']
  #allocation6 [shape = 'u32[2048]{0}', space=vmem, size = 0x2000, scoped, tag = 'scoped memory for diffeq_forward_pallas.2']
  #allocation7 [shape = 'u32[2048]{0}', space=vmem, size = 0x2000, scoped, tag = 'scoped memory for diffeq_forward_pallas.2']
  #allocation8 [shape = 'u32[2048]{0}', space=vmem, size = 0x2000, scoped, tag = 'scoped memory for diffeq_forward_pallas.2']
  #allocation9 [shape = 'u32[2048]{0}', space=vmem, size = 0x2000, scoped, tag = 'scoped memory for diffeq_forward_pallas.2']
  #allocation10 [shape = 'u32[2048]{0}', space=vmem, size = 0x2000, scoped, tag = 'scoped memory for diffeq_forward_pallas.2']
  #allocation11 [shape = 'u32[2048]{0}', space=vmem, size = 0x2000, scoped, tag = 'scoped memory for diffeq_forward_pallas.2']
  #allocation12 [shape = 'u32[2048]{0}', space=vmem, size = 0x2000, scoped, tag = 'scoped memory for diffeq_forward_pallas.2']
  #allocation13 [shape = 'u32[2048]{0}', space=vmem, size = 0x2000, scoped, tag = 'scoped memory for diffeq_forward_pallas.2']
  #allocation14 [shape = 'u32[2048]{0}', space=vmem, size = 0x2000, scoped, tag = 'scoped memory for diffeq_forward_pallas.2']
  #allocation15 [shape = 'u32[2048]{0}', space=vmem, size = 0x2000, scoped, tag = 'scoped memory for diffeq_forward_pallas.2']
  #allocation16 [shape = 'u32[2048]{0}', space=vmem, size = 0x2000, scoped, tag = 'scoped memory for diffeq_forward_pallas.2']
  #allocation17 [shape = 'u32[2048]{0}', space=vmem, size = 0x2000, scoped, tag = 'scoped memory for diffeq_forward_pallas.2']
  #allocation18 [shape = 'u32[2048]{0}', space=vmem, size = 0x2000, scoped, tag = 'scoped memory for diffeq_forward_pallas.2']
  #allocation19 [shape = 'u32[2048]{0}', space=vmem, size = 0x2000, scoped, tag = 'scoped memory for diffeq_forward_pallas.2']
  #allocation20 [shape = 'u32[2048]{0}', space=vmem, size = 0x2000, scoped, tag = 'scoped memory for diffeq_forward_pallas.2']
  #allocation21 [shape = 'u32[2048]{0}', space=vmem, size = 0x2000, scoped, tag = 'scoped memory for diffeq_forward_pallas.2']
  #allocation22 [shape = 'u32[2048]{0}', space=vmem, size = 0x2000, scoped, tag = 'scoped memory for diffeq_forward_pallas.2']
  #allocation23 [shape = 'u32[2048]{0}', space=vmem, size = 0x2000, scoped, tag = 'scoped memory for diffeq_forward_pallas.2']
  %s0 = inlined_call_operand.<no memory space> [shape: f32[1], index: 0, kind: input, shape index: {}]
  %s1 = inlined_call_operand.vmem [shape: f32[1,8,128], index: 1, kind: input, shape index: {}]
  %s2 = inlined_call_operand.<no memory space> [shape: f32[], index: 2, kind: input, shape index: {}]
  %s3 = inlined_call_operand.vmem [shape: f32[1,8,128], index: 3, kind: input, shape index: {}]
  %s4 = inlined_call_operand.vmem [shape: f32[1,8,128], index: 4, kind: input, shape index: {}]
  %s5 = inlined_call_operand.vmem [shape: f32[8], index: 5, kind: input, shape index: {}]
  %s6 = inlined_call_operand.<no memory space> [shape: f32[], index: 6, kind: input, shape index: {}]
  %s7 = inlined_call_operand.vmem [shape: f32[8,128], index: 7, kind: output, shape index: {}]
  %s8 = sld [smem:[#allocation0]]
  $region26: #{diffeq_forward_pallas.2} parent=0
    _
  %s10 = ssub.s32 1, %s8
  %s11 = scalar_select 0, %s10, %s8
  %12 = sst [smem:[#allocation3]] %s0
  %v13 = vstv %s6
  %v14 = vstv %s2
  %v15 = vstv %s2
  %v16 = vstv %s2
  $region1: #{diffeq_forward_pallas.2} parent=0
    #allocation24 [shape = 'u8[4096]{0}', space=vmem, size = 0x1000, dematerialized = true, scoped, tag = 'FusionAdapter Buffer %fusion.6 = f32[8,128]{1,0:T(8,128)} fusion(%param_5.4, %param_6), kind=kLoop, calls=%fused_computation.6.clone, metadata={op_name="jit(diffeq_forward_pallas)/reshape" stack_frame_id=12}']
    #allocation25 [shape = 'u8[12288]{0}', space=vmem, size = 0x3000, dematerialized = true, scoped, tag = 'FusionAdapter Buffer %fusion.1 = f32[3,8,128]{2,1,0:T(8,128)} fusion(%param_1.12, %param_2.6, %param_3.6, %param_4.3), kind=kLoop, calls=%fused_computation.1.clone, metadata={op_name="jit(diffeq_forward_pallas)/concatenate" stack_frame_id=25}']
    // Predicated region
    $region2: #{diffeq_forward_pallas.2} parent=1 // pred_check
      _
    $region3: #{diffeq_forward_pallas.2} parent=1 // pred_check_branch
      %18 = sbr.rel (0) target = $region5
    $region4: #{diffeq_forward_pallas.2} parent=1 // pred_region
      _
    $region5: #{diffeq_forward_pallas.2} parent=1 // pred_fallthru
      _
    // Predicated region
    $region6: #{diffeq_forward_pallas.2} parent=1 // pred_check
      _
    $region7: #{diffeq_forward_pallas.2} parent=1 // pred_check_branch
      %20 = sbr.rel (0) target = $region9
    $region8: #{diffeq_forward_pallas.2} parent=1 // pred_region
      %s22 = ssub.s32 1, 0
      %s23 = smul.u32 8, %s22
      %p24 = scmp.lt.s32.totalorder 0, 0
      %s25 = scalar_select %p24, 0, 0
      %s26 = smul.addr %s25, 8
      %s27 = scalar_lea.vmem %s1, %s26
      %s29 = ssub.s32 1, 0
      %s30 = smul.u32 8, %s29
    $region9: #{diffeq_forward_pallas.2} parent=1 // pred_fallthru
      _
    // Predicated region
    $region10: #{diffeq_forward_pallas.2} parent=1 // pred_check
      _
    $region11: #{diffeq_forward_pallas.2} parent=1 // pred_check_branch
      %32 = sbr.rel (0) target = $region13
    $region12: #{diffeq_forward_pallas.2} parent=1 // pred_region
      %s34 = ssub.s32 1, 0
      %s35 = smul.u32 8, %s34
      %p36 = scmp.lt.s32.totalorder 0, 0
      %s37 = scalar_select %p36, 0, 0
      %s38 = smul.addr %s37, 8
      %s39 = scalar_lea.vmem %s3, %s38
      %s41 = ssub.s32 1, 0
      %s42 = smul.u32 8, %s41
    $region13: #{diffeq_forward_pallas.2} parent=1 // pred_fallthru
      _
    // Predicated region
    $region14: #{diffeq_forward_pallas.2} parent=1 // pred_check
      _
    $region15: #{diffeq_forward_pallas.2} parent=1 // pred_check_branch
      %44 = sbr.rel (0) target = $region17
    $region16: #{diffeq_forward_pallas.2} parent=1 // pred_region
      _
    $region17: #{diffeq_forward_pallas.2} parent=1 // pred_fallthru
      _
    %s46 = ssub.s32 1, 0
    %s47 = smul.u32 8, %s46
    %p48 = scmp.lt.s32.totalorder 0, 0
    %s49 = scalar_select %p48, 0, 0
    %s50 = smul.addr %s49, 8
    %s51 = scalar_lea.vmem %s1, %s50
    %s53 = ssub.s32 1, 0
    %s54 = smul.u32 8, %s53
    %p55 = scmp.lt.s32.totalorder 0, 0
    %s56 = scalar_select %p55, 0, 0
    %s57 = smul.addr %s56, 8
    %s58 = scalar_lea.vmem %s3, %s57
    %s60 = ssub.s32 1, 0
    %s61 = smul.u32 8, %s60
    %p62 = scmp.lt.s32.totalorder 0, 0
    %s63 = scalar_select %p62, 0, 0
    %s64 = smul.addr %s63, 8
    %s65 = scalar_lea.vmem %s1, %s64
    %s67 = ssub.s32 1, 0
    %s68 = smul.u32 8, %s67
    %s70 = ssub.s32 1, 0
    %s71 = smul.u32 8, %s70
    %p72 = scmp.lt.s32.totalorder 0, 0
    %s73 = scalar_select %p72, 0, 0
    %s74 = smul.addr %s73, 8
    %s75 = scalar_lea.vmem %s3, %s74
    %s77 = ssub.s32 1, 0
    %s78 = smul.u32 8, %s77
    %v79 = vld [vmem:[%s5] sm:$0x1]
    %v80 = vlaneseq
    %vm82 = vcmp.lt.s32.totalorder %v80, 8
    %v83 = vsel %vm82, %v79, %v13
    %s85 = ssub.s32 256, 1
    %86 = vst [vmem:[#allocation24] sm:%s85] %v83
    %s87 = ssub.s32 0, 0
    %p88 = scmp.lt.s32.totalorder %s87, 0
    %s89 = scalar_select %p88, 0, 255
    %v90 = vld [vmem:[%s65] sm:%s89]
    %s91 = ssub.s32 0, 0
    %p92 = scmp.lt.s32.totalorder %s91, 0
    %s93 = scalar_select %p92, 0, 255
    %v94 = vld [vmem:[%s75] sm:%s93]
    %v95 = vld [vmem:[%s4] sm:$0xff]
    %96 = xla_tuple %v95, %v15
    %97 = xla_tuple %96
    %v98 = vmax.f32 %v95, %v15
    %99 = xla_tuple %v98
    %100 = xla_tuple %v98, %v14
    %101 = xla_tuple %100
    %v102 = vmax.f32 %v98, %v14
    %103 = xla_tuple %v102
    %s105 = ssub.s32 256, 1
    %106 = vst [vmem:[#allocation25] sm:%s105] %v102
    %107 = xla_tuple %v16, %v94
    %108 = xla_tuple %107
    %v109 = vmax.f32 %v16, %v94
    %110 = xla_tuple %v109
    %111 = xla_tuple %v109, %v14
    %112 = xla_tuple %111
    %v113 = vmax.f32 %v109, %v14
    %114 = xla_tuple %v113
    %s115 = scalar_lea.vmem [#allocation25], 8
    %s117 = ssub.s32 256, 1
    %118 = vst [vmem:[%s115] sm:%s117] %v113
    %119 = xla_tuple %v16, %v15
    %120 = xla_tuple %119
    %v121 = vmax.f32 %v16, %v15
    %122 = xla_tuple %v121
    %123 = xla_tuple %v121, %v90
    %124 = xla_tuple %123
    %v125 = vmax.f32 %v121, %v90
    %126 = xla_tuple %v125
    %s127 = scalar_lea.vmem [#allocation25], 16
    %s129 = ssub.s32 256, 1
    %130 = vst [vmem:[%s127] sm:%s129] %v125
    %s131 = sld [smem:[#allocation3]]
    %v132 = vld [vmem:[#allocation25] sm:$0xff]
    %s133 = scalar_lea.vmem [#allocation25], 8
    %v134 = vld [vmem:[%s133] sm:$0xff]
    %s135 = scalar_lea.vmem [#allocation25], 16
    %v136 = vld [vmem:[%s135] sm:$0xff]
    %v137 = vstv %s131
    %v138 = vmul.f32 %v136, %v137
    %v139 = vand.u32 2147483647, %v138
    %vm140 = vcmp.le.f32.partialorder %v139, 0.7853982
    %vm141 = vcmp.lt.s32.totalorder %v138, 0
    %v142 = vand.u32 %v138, 2139095040
    %v143 = vshrl.u32 %v142, 23
    %v144 = vsub.s32 %v143, 127
    %v145 = vand.u32 2147483647, %v138
    %v146 = vand.u32 %v145, 8388607
    %v147 = vor.u32 %v146, 8388608
    %v148 = vsub.s32 0, %v147
    %v149 = vadd.s32 %v144, 1
    %vm150 = vcmp.gt.s32.totalorder %v149, 0
    %v151 = vsel %vm150, %v149, 0
    %v152 = vshrl.u32 %v151, 5
    %v153 = vand.u32 %v151, 31
    %v154 = vsub.s32 32, %v153
    %v155 = vshrl.u32 683565275, %v154
    %v156 = vshll.u32 683565275, %v153
    %v157 = vshrl.u32 2475754826, %v154
    %v158 = vor.u32 %v156, %v157
    %v159 = vshll.u32 2475754826, %v153
    %v160 = vshrl.u32 2131351028, %v154
    %v161 = vor.u32 %v159, %v160
    %v162 = vshll.u32 2131351028, %v153
    %v163 = vshrl.u32 2102212464, %v154
    %v164 = vor.u32 %v162, %v163
    %v165 = vshll.u32 2102212464, %v153
    %v166 = vshrl.u32 920167782, %v154
    %v167 = vor.u32 %v165, %v166
    %v168 = vshll.u32 920167782, %v153
    %v169 = vshrl.u32 1326507024, %v154
    %v170 = vor.u32 %v168, %v169
    %vm171 = vcmp.lt.s32.totalorder %v152, 1
    %vm172 = vcmp.lt.s32.totalorder %v152, 2
    %vm173 = vcmp.lt.s32.totalorder %v152, 3
    %vm174 = vcmp.lt.s32.totalorder %v152, 4
    %v175 = vsel %vm171, %v155, %v158
    %v176 = vsel %vm174, %v164, 2102212464
    %v177 = vsel %vm173, %v161, %v176
    %v178 = vsel %vm172, %v175, %v177
    %v179 = vsel %vm171, %v158, %v161
    %v180 = vsel %vm174, %v167, 920167782
    %v181 = vsel %vm173, %v164, %v180
    %v182 = vsel %vm172, %v179, %v181
    %v183 = vsel %vm171, %v161, %v164
    %v184 = vsel %vm174, %v170, 1326507024
    %v185 = vsel %vm173, %v167, %v184
    %v186 = vsel %vm172, %v183, %v185
    %v187 = vshll.u32 %v147, 8
    %v188 = vand.u32 %v187, 65535
    %v189 = vshrl.u32 %v187, 16
    %v190 = vand.u32 %v186, 65535
    %v191 = vshrl.u32 %v186, 16
    %v192 = vmul.u32 %v188, %v190
    %v193 = vmul.u32 %v188, %v191
    %v194 = vmul.u32 %v189, %v190
    %v195 = vmul.u32 %v189, %v191
    %v196 = vshll.u32 %v193, 16
    %v197 = vshrl.u32 %v193, 16
    %v198 = vshll.u32 %v194, 16
    %v199 = vshrl.u32 %v194, 16
    %vm200 = vc.u32 %v192, %v196
    %v201 = vsel %vm200, 1, 0
    %v202 = vadd.s32 %v192, %v196
    %v203 = vadd.s32 %v195, %v201
    %vm204 = vc.u32 %v202, %v198
    %v205 = vsel %vm204, 1, 0
    %v206 = vadd.s32 %v202, %v198
    %v207 = vadd.s32 %v203, %v205
    %v208 = vadd.s32 %v207, %v197
    %v209 = vadd.s32 %v208, %v199
    %v210 = vand.u32 %v187, 65535
    %v211 = vshrl.u32 %v187, 16
    %v212 = vand.u32 %v182, 65535
    %v213 = vshrl.u32 %v182, 16
    %v214 = vmul.u32 %v210, %v212
    %v215 = vmul.u32 %v210, %v213
    %v216 = vmul.u32 %v211, %v212
    %v217 = vmul.u32 %v211, %v213
    %v218 = vshll.u32 %v215, 16
    %v219 = vshrl.u32 %v215, 16
    %v220 = vshll.u32 %v216, 16
    %v221 = vshrl.u32 %v216, 16
    %vm222 = vc.u32 %v214, %v218
    %v223 = vsel %vm222, 1, 0
    %v224 = vadd.s32 %v214, %v218
    %v225 = vadd.s32 %v217, %v223
    %vm226 = vc.u32 %v224, %v220
    %v227 = vsel %vm226, 1, 0
    %v228 = vadd.s32 %v224, %v220
    %v229 = vadd.s32 %v225, %v227
    %v230 = vadd.s32 %v229, %v219
    %v231 = vadd.s32 %v230, %v221
    %v232 = vmul.u32 %v187, %v178
    %v233 = vadd.s32 %v209, %v228
    %vm234 = vc.u32 %v209, %v228
    %v235 = vadd.s32 %v231, 1
    %v236 = vsel %vm234, %v235, %v231
    %v237 = vadd.s32 %v232, %v236
    %v238 = vadd.s32 %v237, 536870912
    %v239 = vshrl.u32 %v238, 30
    %v240 = vshll.u32 %v239, 30
    %v241 = vsub.s32 %v237, %v240
    %vm242 = vcmp.lt.s32.totalorder %v241, 0
    %v243 = vsub.s32 0, %v241
    %v244 = vsel %vm242, %v243, %v241
    %v245 = vclz %v244
    %v246 = vsub.s32 %v245, 2
    %vm247 = vcmp.gt.s32.totalorder 0, %v246
    %v248 = vsel %vm247, 0, %v246
    %v249 = vsub.s32 32, %v248
    %v250 = vshll.u32 %v241, %v248
    %v251 = vshrl.u32 %v233, %v249
    %v252 = vor.u32 %v250, %v251
    %v253 = vsub.s32 4294967266, %v248
    %v254 = vadd.s32 %v253, 127
    %v255 = vshll.u32 %v254, 23
    %v256 = vor.u32 4788187, %v255
    %v257 = vand.u32 2147483647, %v256
    %v259 = vcvt.s32.f32 %v252
    %v260 = vmul.f32 %v259, %v257
    %v261 = vxor.u32 %v260, 2147483648
    %v262 = vsel %vm141, %v261, %v260
    %v263 = vsub.s32 4, %v239
    %v264 = vsel %vm141, %v263, %v239
    %v265 = vsel %vm140, %v138, %v262
    %v266 = vsel %vm140, 0, %v264
    %v267 = vmul.f32 %v265, %v265
    %v268 = vmul.f32 %v267, -0.001358992
    %v269 = vadd.f32 %v268, 0.041655596
    %v270 = vmul.f32 %v267, %v269
    %v271 = vadd.f32 %v270, -0.4999988
    %v272 = vmul.f32 %v267, %v271
    %v273 = vadd.f32 1.0, %v272
    %v274 = vmul.f32 %v265, %v265
    %v275 = vmul.f32 %v274, -0.00019511016
    %v276 = vadd.f32 %v275, 0.008332121
    %v277 = vmul.f32 %v274, %v276
    %v278 = vadd.f32 %v277, -0.16666654
    %v279 = vmul.f32 %v274, %v278
    %v280 = vadd.f32 %v279, 1.0
    %v281 = vmul.f32 %v280, %v265
    %vm282 = vweird.f32 %v138
    %v283 = vadd.s32 %v266, 3
    %v284 = vand.u32 %v283, 3
    %vm285 = vcmp.lt.s32.totalorder %v284, 2
    %vm286 = vcmp.eq.s32.totalorder %v284, 0
    %v287 = vxor.u32 %v281, 2147483648
    %v288 = vsel %vm286, %v273, %v287
    %vm289 = vcmp.eq.s32.totalorder %v284, 2
    %v290 = vxor.u32 %v273, 2147483648
    %v291 = vsel %vm289, %v290, %v281
    %v292 = vsel %vm285, %v288, %v291
    %v293 = vsel %vm282, nan, %v292
    %v294 = vmul.f32 %v134, %v293
    %v295 = vld [vmem:[#allocation24] sm:$0xff]
    %v296 = vmul.f32 %v132, %v295
    %v297 = vsub.f32 %v294, %v296
    %298 = vst [vmem:[%s7] sm:$0xff] %v297
    // Predicated region
    $region18: #{diffeq_forward_pallas.2} parent=1 // pred_check
      _
    $region19: #{diffeq_forward_pallas.2} parent=1 // pred_check_branch
      %300 = sbr.rel (0) target = $region21
    $region20: #{diffeq_forward_pallas.2} parent=1 // pred_region
      _
    $region21: #{diffeq_forward_pallas.2} parent=1 // pred_fallthru
      _
    // Predicated region
    $region22: #{diffeq_forward_pallas.2} parent=1 // pred_check
      _
    $region23: #{diffeq_forward_pallas.2} parent=1 // pred_check_branch
      %302 = sbr.rel (0) target = $region25
    $region24: #{diffeq_forward_pallas.2} parent=1 // pred_region
      _
    $region25: #{diffeq_forward_pallas.2} parent=1 // pred_fallthru
      _

</llo_original>
